<compile_context>
chip_gen: v7x
topology: tpu7x:2x2x1
jax: 0.10.0
libtpu: 0.0.40
codegen_flags: <defaults>
</compile_context>

<pallas_src>
import functools

import jax
import jax.numpy as jnp
from jax.experimental import pallas as pl
from jax.experimental.pallas import tpu as pltpu


def _miou_kernel(x_ref, t_ref, inter_ref, union_ref, inter_acc, union_acc,
                 *, hw, hw_tile, needs_mask):
    h = pl.program_id(1)
    num_h = pl.num_programs(1)

    @pl.when(h == 0)
    def _():
        inter_acc[...] = jnp.zeros_like(inter_acc)
        union_acc[...] = jnp.zeros_like(union_acc)

    x = x_ref[0].astype(jnp.float32)   # (C, HW_TILE) logits (bf16/f32 in HBM)
    t = t_ref[0]                       # (1, HW_TILE) int32 labels
    C = x.shape[0]

    # Numerically-stable softmax over the channel (sublane) axis.
    m = jnp.max(x, axis=0, keepdims=True)
    e = jnp.exp(x - m)
    denom = jnp.sum(e, axis=0, keepdims=True)
    sm = e * pl.reciprocal(denom, approx=True)        # EUP vrcp, free-ish slot

    # Fused one-hot: never materialize onehot / prod / (sm + onehot - prod).
    cls_idx = jax.lax.broadcasted_iota(jnp.int32, (C, hw_tile), 0)
    hit = cls_idx == t                                 # (C, HW_TILE) bool

    if needs_mask:
        lane = jax.lax.broadcasted_iota(jnp.int32, (1, hw_tile), 1)
        valid = (h * hw_tile + lane) < hw              # (1, HW_TILE) bool
        hit = jnp.logical_and(hit, valid)
        sm = jnp.where(valid, sm, 0.0)

    # Element-wise IoU terms, accumulated lane-wide (pure VPU adds; the
    # cross-lane reduce is deferred to the final spatial step).
    #   inter_elem = sm * onehot            == where(hit, sm, 0)
    #   union_elem = sm + onehot - sm*onehot == where(hit, 1, sm)
    inter_acc[...] += jnp.where(hit, sm, 0.0)
    union_acc[...] += jnp.where(hit, 1.0, sm)

    @pl.when(h == num_h - 1)
    def _():
        # Single cross-lane reduce per batch element; output blocks written
        # exactly once before the batch block index changes.
        inter_ref[0] = jnp.sum(inter_acc[...], axis=1, keepdims=True)   # (C,1)
        union_ref[0] = jnp.sum(union_acc[...], axis=1, keepdims=True)   # (C,1)


def _pick_hw_tile(hw, c, itemsize):
    """Pick a lane-dense spatial tile that keeps double-buffered DMA tiny."""
    if hw <= 8192:
        return hw                      # single tile, block == full array dim
    budget = 2 * 1024 * 1024           # ~2 MiB for one logits tile
    t = budget // max(1, c * itemsize)
    t = (t // 512) * 512
    return max(512, min(8192, t))


def miou_loss(inputs, target, weights, *, eps=1e-8, hw_tile=None):
    """inputs:  (N, C, H, W) logits (f32 or bf16, streamed in native dtype)
       target:  (N, H, W) integer class ids in [0, C)
       weights: (C,) per-class weights
       returns: scalar f32 loss == -mean(weights * inter / (union + eps))"""
    N, C, H, W = inputs.shape
    HW = H * W

    x = inputs.reshape(N, C, HW)                    # keep native dtype
    t = target.reshape(N, 1, HW).astype(jnp.int32)

    itemsize = jnp.dtype(x.dtype).itemsize
    if hw_tile is None:
        hw_tile = _pick_hw_tile(HW, C, itemsize)
    num_h = pl.cdiv(HW, hw_tile)
    needs_mask = (HW % hw_tile) != 0

    # Scoped VMEM: double-buffered (x tile + t tile) + 2 f32 lane-wide
    # accumulators + outputs + headroom.
    tile_bytes = C * hw_tile * itemsize + hw_tile * 4
    acc_bytes = 2 * C * hw_tile * 4
    vmem_limit = int(min(max(4 * tile_bytes + acc_bytes + (4 << 20), 16 << 20),
                         32 << 20))

    kernel = functools.partial(
        _miou_kernel, hw=HW, hw_tile=hw_tile, needs_mask=needs_mask)

    inter, union = pl.pallas_call(
        kernel,
        out_shape=(
            jax.ShapeDtypeStruct((N, C, 1), jnp.float32),
            jax.ShapeDtypeStruct((N, C, 1), jnp.float32),
        ),
        grid_spec=pltpu.PrefetchScalarGridSpec(
            num_scalar_prefetch=0,
            grid=(N, num_h),                       # reduction axis (HW) last
            in_specs=[
                pl.BlockSpec((1, C, hw_tile), lambda b, h: (b, 0, h)),
                pl.BlockSpec((1, 1, hw_tile), lambda b, h: (b, 0, h)),
            ],
            out_specs=[
                pl.BlockSpec((1, C, 1), lambda b, h: (b, 0, 0)),
                pl.BlockSpec((1, C, 1), lambda b, h: (b, 0, 0)),
            ],
            scratch_shapes=[
                pltpu.VMEM((C, hw_tile), jnp.float32),   # inter accumulator
                pltpu.VMEM((C, hw_tile), jnp.float32),   # union accumulator
            ],
        ),
        compiler_params=pltpu.CompilerParams(
            dimension_semantics=("parallel", "arbitrary"),
            vmem_limit_bytes=vmem_limit,
        ),
    )(x, t)

    w = weights.astype(jnp.float32)
    inter = inter[:, :, 0]                          # (N, C)
    union = union[:, :, 0]                          # (N, C)
    loss = w[None, :] * inter / (union + jnp.float32(eps))
    return -jnp.mean(loss)


def _miou_loss_ref(inputs, target, weights, eps=1e-8):
    """Pure-JAX reference mirroring the PyTorch module."""
    N, C, H, W = inputs.shape
    onehot = jax.nn.one_hot(target, C, axis=1, dtype=jnp.float32)  # (N,C,H,W)
    sm = jax.nn.softmax(inputs.astype(jnp.float32), axis=1)
    inter = (sm * onehot).reshape(N, C, -1).sum(-1)
    union = (sm + onehot - sm * onehot).reshape(N, C, -1).sum(-1)
    loss = weights[None, :].astype(jnp.float32) * inter / (union + eps)
    return -jnp.mean(loss)


if __name__ == "__main__":
    key = jax.random.PRNGKey(0)
    k_in, k_tgt, k_in2, k_tgt2 = jax.random.split(key, 4)

    # Primary small shape (NCHW, like the PyTorch module).
    N, C, H, W = 2, 4, 16, 16
    inputs = jax.random.normal(k_in, (N, C, H, W), dtype=jnp.float32)
    target = jax.random.randint(k_tgt, (N, H, W), 0, C, dtype=jnp.int32)
    weights = jnp.array([0.25, 0.5, 0.75, 1.0], dtype=jnp.float32)

    loss = jax.block_until_ready(miou_loss(inputs, target, weights))
    ref = jax.block_until_ready(_miou_loss_ref(inputs, target, weights))
    assert jnp.allclose(loss, ref, atol=1e-3, rtol=1e-3), (loss, ref)

    # Exercise the masked partial-tile / multi-step accumulation path
    # (HW = 169 not divisible by 128).
    H2 = W2 = 13
    inputs2 = jax.random.normal(k_in2, (N, C, H2, W2), dtype=jnp.float32)
    target2 = jax.random.randint(k_tgt2, (N, H2, W2), 0, C, dtype=jnp.int32)
    loss2 = jax.block_until_ready(
        miou_loss(inputs2, target2, weights, hw_tile=128))
    ref2 = jax.block_until_ready(_miou_loss_ref(inputs2, target2, weights))
    assert jnp.allclose(loss2, ref2, atol=1e-3, rtol=1e-3), (loss2, ref2)

    # Native bf16 logits (no wrapper up-cast; kernel casts to f32 internally).
    loss3 = jax.block_until_ready(
        miou_loss(inputs.astype(jnp.bfloat16), target, weights))
    ref3 = jax.block_until_ready(
        _miou_loss_ref(inputs.astype(jnp.bfloat16), target, weights))
    assert jnp.allclose(loss3, ref3, atol=1e-3, rtol=1e-3), (loss3, ref3)

    print("KERNEL_OK")
</pallas_src>

<mosaic_0001>
module attributes {stable_mosaic.version = 11 : i64} {
  func.func @_miou_kernel(%arg0: i32, %arg1: i32, %arg2: memref<1x4x256xf32, #tpu.memory_space<vmem>>, %arg3: memref<1x1x256xi32, #tpu.memory_space<vmem>>, %arg4: memref<1x4x1xf32, #tpu.memory_space<vmem>>, %arg5: memref<1x4x1xf32, #tpu.memory_space<vmem>>, %arg6: memref<4x256xf32, #tpu.memory_space<vmem>>, %arg7: memref<4x256xf32, #tpu.memory_space<vmem>>) attributes {dimension_semantics = [#tpu.dimension_semantics<parallel>, #tpu.dimension_semantics<arbitrary>], iteration_bounds = array<i64: 2, 1>, scalar_prefetch = 0 : i64, scratch_operands = 2 : i64, tpu.core_type = #tpu.core_type<tc>, window_params = [{transform_indices = @transform_0, window_bounds = array<i64: 1, 4, 256>}, {transform_indices = @transform_1, window_bounds = array<i64: 1, 1, 256>}, {transform_indices = @transform_2, window_bounds = array<i64: 1, 4, 1>}, {transform_indices = @transform_3, window_bounds = array<i64: 1, 4, 1>}]} {
    %c0_i32 = arith.constant 0 : i32
    %0 = arith.cmpi eq, %arg1, %c0_i32 : i32
    %1 = arith.extui %0 : i1 to i32
    %c0_i32_0 = arith.constant 0 : i32
    %2 = arith.cmpi ne, %1, %c0_i32_0 : i32
    scf.if %2 {
      %cst_19 = arith.constant 0.000000e+00 : f32
      %33 = vector.broadcast %cst_19 : f32 to vector<4x256xf32>
      %c0_20 = arith.constant 0 : index
      %c0_21 = arith.constant 0 : index
      %34 = vector.load %arg6[%c0_20, %c0_21] : memref<4x256xf32, #tpu.memory_space<vmem>>, vector<4x256xf32>
      tpu.vector_store %arg6[%c0_20, %c0_21], %33 {strides = array<i32>} : memref<4x256xf32, #tpu.memory_space<vmem>>, vector<4x256xf32>,
      %cst_22 = arith.constant 0.000000e+00 : f32
      %35 = vector.broadcast %cst_22 : f32 to vector<4x256xf32>
      %c0_23 = arith.constant 0 : index
      %c0_24 = arith.constant 0 : index
      %36 = vector.load %arg7[%c0_23, %c0_24] : memref<4x256xf32, #tpu.memory_space<vmem>>, vector<4x256xf32>
      tpu.vector_store %arg7[%c0_23, %c0_24], %35 {strides = array<i32>} : memref<4x256xf32, #tpu.memory_space<vmem>>, vector<4x256xf32>,
    } else {
    }
    %c0 = arith.constant 0 : index
    %c0_1 = arith.constant 0 : index
    %c0_2 = arith.constant 0 : index
    %3 = vector.load %arg2[%c0, %c0_1, %c0_2] : memref<1x4x256xf32, #tpu.memory_space<vmem>>, vector<1x4x256xf32>
    %4 = vector.shape_cast %3 : vector<1x4x256xf32> to vector<4x256xf32>
    %c0_3 = arith.constant 0 : index
    %c0_4 = arith.constant 0 : index
    %c0_5 = arith.constant 0 : index
    %5 = vector.load %arg3[%c0_3, %c0_4, %c0_5] : memref<1x1x256xi32, #tpu.memory_space<vmem>>, vector<1x1x256xi32>
    %6 = vector.shape_cast %5 : vector<1x1x256xi32> to vector<1x256xi32>
    %cst = arith.constant dense<0xFF800000> : vector<256xf32>
    %7 = vector.multi_reduction <maximumf>, %4, %cst [0] : vector<4x256xf32> to vector<256xf32>
    %8 = vector.shape_cast %7 : vector<256xf32> to vector<1x256xf32>
    %9 = vector.broadcast %8 : vector<1x256xf32> to vector<4x256xf32>
    %10 = arith.subf %4, %9 : vector<4x256xf32>
    %11 = math.exp %10 : vector<4x256xf32>
    %cst_6 = arith.constant dense<0.000000e+00> : vector<256xf32>
    %12 = vector.multi_reduction <add>, %11, %cst_6 [0] : vector<4x256xf32> to vector<256xf32>
    %13 = vector.shape_cast %12 : vector<256xf32> to vector<1x256xf32>
    %14 = tpu.reciprocal %13 {approx = true} : vector<1x256xf32> -> vector<1x256xf32>
    %15 = vector.broadcast %14 : vector<1x256xf32> to vector<4x256xf32>
    %16 = arith.mulf %11, %15 : vector<4x256xf32>
    %17 = tpu.iota {dimensions = array<i32: 0>} : vector<4x256xi32>
    %18 = vector.broadcast %6 : vector<1x256xi32> to vector<4x256xi32>
    %19 = arith.cmpi eq, %17, %18 : vector<4x256xi32>
    %c0_7 = arith.constant 0 : index
    %c0_8 = arith.constant 0 : index
    %20 = vector.load %arg6[%c0_7, %c0_8] : memref<4x256xf32, #tpu.memory_space<vmem>>, vector<4x256xf32>
    %cst_9 = arith.constant 0.000000e+00 : f32
    %21 = vector.broadcast %cst_9 : f32 to vector<4x256xf32>
    %22 = arith.select %19, %16, %21 : vector<4x256xi1>, vector<4x256xf32>
    %23 = arith.addf %20, %22 : vector<4x256xf32>
    %c0_10 = arith.constant 0 : index
    %c0_11 = arith.constant 0 : index
    %24 = vector.load %arg6[%c0_10, %c0_11] : memref<4x256xf32, #tpu.memory_space<vmem>>, vector<4x256xf32>
    tpu.vector_store %arg6[%c0_10, %c0_11], %23 {strides = array<i32>} : memref<4x256xf32, #tpu.memory_space<vmem>>, vector<4x256xf32>,
    %c0_12 = arith.constant 0 : index
    %c0_13 = arith.constant 0 : index
    %25 = vector.load %arg7[%c0_12, %c0_13] : memref<4x256xf32, #tpu.memory_space<vmem>>, vector<4x256xf32>
    %cst_14 = arith.constant 1.000000e+00 : f32
    %26 = vector.broadcast %cst_14 : f32 to vector<4x256xf32>
    %27 = arith.select %19, %26, %16 : vector<4x256xi1>, vector<4x256xf32>
    %28 = arith.addf %25, %27 : vector<4x256xf32>
    %c0_15 = arith.constant 0 : index
    %c0_16 = arith.constant 0 : index
    %29 = vector.load %arg7[%c0_15, %c0_16] : memref<4x256xf32, #tpu.memory_space<vmem>>, vector<4x256xf32>
    tpu.vector_store %arg7[%c0_15, %c0_16], %28 {strides = array<i32>} : memref<4x256xf32, #tpu.memory_space<vmem>>, vector<4x256xf32>,
    %c0_i32_17 = arith.constant 0 : i32
    %30 = arith.cmpi eq, %arg1, %c0_i32_17 : i32
    %31 = arith.extui %30 : i1 to i32
    %c0_i32_18 = arith.constant 0 : i32
    %32 = arith.cmpi ne, %31, %c0_i32_18 : i32
    scf.if %32 {
      %c0_19 = arith.constant 0 : index
      %c0_20 = arith.constant 0 : index
      %33 = vector.load %arg6[%c0_19, %c0_20] : memref<4x256xf32, #tpu.memory_space<vmem>>, vector<4x256xf32>
      %cst_21 = arith.constant dense<0.000000e+00> : vector<4xf32>
      %34 = vector.multi_reduction <add>, %33, %cst_21 [1] : vector<4x256xf32> to vector<4xf32>
      %35 = vector.shape_cast %34 : vector<4xf32> to vector<4x1xf32>
      %c0_22 = arith.constant 0 : index
      %c0_23 = arith.constant 0 : index
      %c0_24 = arith.constant 0 : index
      %36 = vector.load %arg4[%c0_22, %c0_23, %c0_24] : memref<1x4x1xf32, #tpu.memory_space<vmem>>, vector<1x4x1xf32>
      %37 = vector.shape_cast %36 : vector<1x4x1xf32> to vector<4x1xf32>
      %38 = vector.shape_cast %35 : vector<4x1xf32> to vector<1x4x1xf32>
      tpu.vector_store %arg4[%c0_22, %c0_23, %c0_24], %38 {strides = array<i32>} : memref<1x4x1xf32, #tpu.memory_space<vmem>>, vector<1x4x1xf32>,
      %c0_25 = arith.constant 0 : index
      %c0_26 = arith.constant 0 : index
      %39 = vector.load %arg7[%c0_25, %c0_26] : memref<4x256xf32, #tpu.memory_space<vmem>>, vector<4x256xf32>
      %cst_27 = arith.constant dense<0.000000e+00> : vector<4xf32>
      %40 = vector.multi_reduction <add>, %39, %cst_27 [1] : vector<4x256xf32> to vector<4xf32>
      %41 = vector.shape_cast %40 : vector<4xf32> to vector<4x1xf32>
      %c0_28 = arith.constant 0 : index
      %c0_29 = arith.constant 0 : index
      %c0_30 = arith.constant 0 : index
      %42 = vector.load %arg5[%c0_28, %c0_29, %c0_30] : memref<1x4x1xf32, #tpu.memory_space<vmem>>, vector<1x4x1xf32>
      %43 = vector.shape_cast %42 : vector<1x4x1xf32> to vector<4x1xf32>
      %44 = vector.shape_cast %41 : vector<4x1xf32> to vector<1x4x1xf32>
      tpu.vector_store %arg5[%c0_28, %c0_29, %c0_30], %44 {strides = array<i32>} : memref<1x4x1xf32, #tpu.memory_space<vmem>>, vector<1x4x1xf32>,
    } else {
    }
    return
  }
  func.func @transform_0(%arg0: i32, %arg1: i32) -> (i32, i32, i32) {
    %c0_i32 = arith.constant 0 : i32
    %c0_i32_0 = arith.constant 0 : i32
    return %arg0, %c0_i32, %arg1 : i32, i32, i32
  }
  func.func @transform_1(%arg0: i32, %arg1: i32) -> (i32, i32, i32) {
    %c0_i32 = arith.constant 0 : i32
    %c0_i32_0 = arith.constant 0 : i32
    return %arg0, %c0_i32, %arg1 : i32, i32, i32
  }
  func.func @transform_2(%arg0: i32, %arg1: i32) -> (i32, i32, i32) {
    %c0_i32 = arith.constant 0 : i32
    %c0_i32_0 = arith.constant 0 : i32
    %c0_i32_1 = arith.constant 0 : i32
    return %arg0, %c0_i32, %c0_i32_0 : i32, i32, i32
  }
  func.func @transform_3(%arg0: i32, %arg1: i32) -> (i32, i32, i32) {
    %c0_i32 = arith.constant 0 : i32
    %c0_i32_0 = arith.constant 0 : i32
    %c0_i32_1 = arith.constant 0 : i32
    return %arg0, %c0_i32, %c0_i32_0 : i32, i32, i32
  }
}

</mosaic_0001>

<llo_original>
// kernel: tpu_custom_call.1
$region0: #{tpu_custom_call.1}
  #allocation0 [shape = 'u32[]', space=smem, size = 0x4, offset = 0x4, fixed_abs, tag = 'smem constant byte address 0x4 - core index']
  #allocation1 [shape = 'u32[144,128]{1,0:T(1,128)}', space=vmem, size = 0x12000, scoped, tag = 'internal scratch']
  #allocation2 [shape = 'f32[4,256]{1,0:T(4,128)}', space=vmem, size = 0x1000, scoped, tag = 'scratch operand']
  #allocation3 [shape = 'f32[4,256]{1,0:T(4,128)}', space=vmem, size = 0x1000, scoped, tag = 'scratch operand']
  %s0 = inlined_call_operand.hbm [shape: f32[2,4,256], index: 0, kind: input, shape index: {}]
  %s1 = inlined_call_operand.hbm [shape: s32[2,1,256], index: 1, kind: input, shape index: {}]
  %s2 = inlined_call_operand.vmem [shape: f32[2,4,1], index: 2, kind: output, shape index: {0}]
  %s3 = inlined_call_operand.vmem [shape: f32[2,4,1], index: 3, kind: output, shape index: {1}]
  %4 = xla_tuple %s2, %s3
  %s5 = sld [smem:[#allocation0]]
  $region65: #{tpu_custom_call.1} parent=0
    _
  %s7 = ssub.s32 1, %s5
  %s8 = scalar_select 0, %s7, %s5
  $region1: #{tpu_custom_call.1} parent=0
    #allocation4 [shape = 'u8[8192]{0}', space=vmem, size = 0x2000, scoped, tag = 'input window, operand 0']
    #allocation5 [shape = 's32[2]{0}', space=sflag, size = 0x8, scoped, tag = 'scoped memory for tpu_custom_call.1']
    #allocation6 [shape = 'u8[2048]{0}', space=vmem, size = 0x800, scoped, tag = 'input window, operand 1']
    #allocation7 [shape = 's32[2]{0}', space=sflag, size = 0x8, scoped, tag = 'scoped memory for tpu_custom_call.1']
    %9 = vsyncpa [#allocation5], 0
    %s10 = scalar_lea.sflag [#allocation5], 1
    %11 = vsyncpa %s10, 0
    %12 = vsyncpa [#allocation7], 0
    %s13 = scalar_lea.sflag [#allocation7], 1
    %14 = vsyncpa %s13, 0
    loop: start=0, step=1, limit=4
    $region2: #{tpu_custom_call.1} parent=1 // loop_pre_header
      _
    $region3: #{tpu_custom_call.1} parent=1 // loop_header
      %s16 = sphi 0, %s20
      %p17 = scmp.ge.s32.totalorder %s16, 4
      %s23 = sphi 0, %s35
      %s24 = sphi 0, %s31
      %s25 = sphi 0, %s23
      %s26 = sphi 0, %s24
      %s27 = sphi 0, %s25
      %s28 = sphi 0, %s26
      %s40 = sphi 0, %s42
      %s43 = sphi 0, %s40
      %s44 = sphi 0, %s43
      %s60 = sphi 0, %s44
      %s68 = sphi 0, %s70
      %s71 = sphi 0, %s68
      %s72 = sphi 0, %s71
      %s88 = sphi 0, %s72
      %s94 = sphi 0, %s96
      %s97 = sphi 0, %s94
      %s98 = sphi 0, %s97
      %s114 = sphi 0, %s98
      %s120 = sphi 0, %s122
      %s123 = sphi 0, %s120
      %s124 = sphi 0, %s123
      %s140 = sphi 0, %s124
    $region4: #{tpu_custom_call.1} parent=1 // loop_header_branch
      %19 = sbr.rel (%p17) target = $region8
    $region5: #{tpu_custom_call.1} parent=1 // loop_body
      %s21 = ssub.s32 %s16, 1
      %s22 = ssub.s32 %s16, 2
      %s29 = sadd.s32 1, %s24
      %p30 = scmp.ge.s32.totalorder %s29, 1
      %s31 = scalar_select %p30, 0, %s29
      %s32 = sadd.s32 1, %s23
      %s33 = scalar_select %p30, %s32, %s23
      %p34 = scmp.ge.s32.totalorder %s33, 2
      %s35 = scalar_select %p34, 0, %s33
      %s36 = ssub.s32 %s23, %s35
      %s37 = ssub.s32 %s24, %s31
      %s38 = sor.u32 %s36, %s37
      %p39 = scmp.eq.s32.totalorder %s38, 0
      %s41 = sadd.s32 %s40, 1
      %s42 = scalar_select %p39, %s40, %s41
      %p45 = pneg %p39
      %p46 = scmp.eq.s32.totalorder %s16, 1
      %p47 = por %p45, %p46
      %p48 = scmp.ne.s32.totalorder %s40, %s43
      %p49 = scmp.eq.s32.totalorder %s16, 0
      %p50 = por %p48, %p49
      %p51 = scmp.ne.s32.totalorder %s40, %s43
      %p52 = scmp.eq.s32.totalorder %s21, 1
      %p53 = por %p51, %p52
      %p54 = scmp.ne.s32.totalorder %s43, %s44
      %p55 = scmp.eq.s32.totalorder %s21, 0
      %p56 = por %p54, %p55
      %p57 = scmp.ne.s32.totalorder %s43, %s44
      %p58 = scmp.eq.s32.totalorder %s22, 1
      %p59 = por %p57, %p58
      %p61 = scmp.ne.s32.totalorder %s44, %s60
      %p62 = scmp.eq.s32.totalorder %s22, 0
      %p63 = por %p61, %p62
      %s64 = ssub.s32 %s23, %s35
      %s65 = ssub.s32 %s24, %s31
      %s66 = sor.u32 %s64, %s65
      %p67 = scmp.eq.s32.totalorder %s66, 0
      %s69 = sadd.s32 %s68, 1
      %s70 = scalar_select %p67, %s68, %s69
      %p73 = pneg %p67
      %p74 = scmp.eq.s32.totalorder %s16, 1
      %p75 = por %p73, %p74
      %p76 = scmp.ne.s32.totalorder %s68, %s71
      %p77 = scmp.eq.s32.totalorder %s16, 0
      %p78 = por %p76, %p77
      %p79 = scmp.ne.s32.totalorder %s68, %s71
      %p80 = scmp.eq.s32.totalorder %s21, 1
      %p81 = por %p79, %p80
      %p82 = scmp.ne.s32.totalorder %s71, %s72
      %p83 = scmp.eq.s32.totalorder %s21, 0
      %p84 = por %p82, %p83
      %p85 = scmp.ne.s32.totalorder %s71, %s72
      %p86 = scmp.eq.s32.totalorder %s22, 1
      %p87 = por %p85, %p86
      %p89 = scmp.ne.s32.totalorder %s72, %s88
      %p90 = scmp.eq.s32.totalorder %s22, 0
      %p91 = por %p89, %p90
      %s92 = ssub.s32 %s23, %s35
      %p93 = scmp.eq.s32.totalorder %s92, 0
      %s95 = sadd.s32 %s94, 1
      %s96 = scalar_select %p93, %s94, %s95
      %p99 = pneg %p93
      %p100 = scmp.eq.s32.totalorder %s16, 1
      %p101 = por %p99, %p100
      %p102 = scmp.ne.s32.totalorder %s94, %s97
      %p103 = scmp.eq.s32.totalorder %s16, 0
      %p104 = por %p102, %p103
      %p105 = scmp.ne.s32.totalorder %s94, %s97
      %p106 = scmp.eq.s32.totalorder %s21, 1
      %p107 = por %p105, %p106
      %p108 = scmp.ne.s32.totalorder %s97, %s98
      %p109 = scmp.eq.s32.totalorder %s21, 0
      %p110 = por %p108, %p109
      %p111 = scmp.ne.s32.totalorder %s97, %s98
      %p112 = scmp.eq.s32.totalorder %s22, 1
      %p113 = por %p111, %p112
      %p115 = scmp.ne.s32.totalorder %s98, %s114
      %p116 = scmp.eq.s32.totalorder %s22, 0
      %p117 = por %p115, %p116
      %s118 = ssub.s32 %s23, %s35
      %p119 = scmp.eq.s32.totalorder %s118, 0
      %s121 = sadd.s32 %s120, 1
      %s122 = scalar_select %p119, %s120, %s121
      %p125 = pneg %p119
      %p126 = scmp.eq.s32.totalorder %s16, 1
      %p127 = por %p125, %p126
      %p128 = scmp.ne.s32.totalorder %s120, %s123
      %p129 = scmp.eq.s32.totalorder %s16, 0
      %p130 = por %p128, %p129
      %p131 = scmp.ne.s32.totalorder %s120, %s123
      %p132 = scmp.eq.s32.totalorder %s21, 1
      %p133 = por %p131, %p132
      %p134 = scmp.ne.s32.totalorder %s123, %s124
      %p135 = scmp.eq.s32.totalorder %s21, 0
      %p136 = por %p134, %p135
      %p137 = scmp.ne.s32.totalorder %s123, %s124
      %p138 = scmp.eq.s32.totalorder %s22, 1
      %p139 = por %p137, %p138
      %p141 = scmp.ne.s32.totalorder %s124, %s140
      %p142 = scmp.eq.s32.totalorder %s22, 0
      %p143 = por %p141, %p142
      %p144 = scmp.le.s32.totalorder 1, %s16
      %p145 = scmp.lt.s32.totalorder %s16, 3
      %p146 = pnand %p144, %p145
      %p147 = pneg %p146
      // Predicated region
      $region9: #{tpu_custom_call.1} parent=5 // pred_check
        _
      $region10: #{tpu_custom_call.1} parent=5 // pred_check_branch
        %149 = sbr.rel (%p146) target = $region12
      $region11: #{tpu_custom_call.1} parent=5 // pred_region
        %s150 = ssub.s32 %s16, 1
      $region12: #{tpu_custom_call.1} parent=5 // pred_fallthru
        _
      %p151 = scmp.lt.s32.totalorder %s16, 2
      // Predicated region
      $region13: #{tpu_custom_call.1} parent=5 // pred_check
        %p152 = pneg %p151
      $region14: #{tpu_custom_call.1} parent=5 // pred_check_branch
        %154 = sbr.rel (%p152) target = $region16
      $region15: #{tpu_custom_call.1} parent=5 // pred_region
        // Predicated region
        $region17: #{tpu_custom_call.1} parent=15 // pred_check
          %p155 = pneg %p50
        $region18: #{tpu_custom_call.1} parent=15 // pred_check_branch
          %157 = sbr.rel (%p155) target = $region20
        $region19: #{tpu_custom_call.1} parent=15 // pred_region
          %s158 = sand.u32 %s40, 1
          %s159 = scalar_lea.sflag [#allocation5], %s158
          %s160 = sand.u32 %s40, 1
          %s161 = smul.addr %s160, 8
          %s162 = scalar_lea.vmem [#allocation4], %s161
          %s163 = smul.u32 2, %s24
          %s165 = ssub.s32 128, 128
          %166 = vsyncadd %s159, %s165
          %s167 = smul.addr %s23, 2
          %s168 = sadd.s32 %s163, %s167
          %s169 = smul.addr %s168, 64
          %s170 = scalar_lea.hbm %s0, %s169
          %s172 = sshll.u32 %s162, 4
          %s173 = int_to_ptr.vmem [resolvable:$true] %s172
          %175 = dma.hbm_to_vmem [thread:$0]  %s170, 128, %s173, %s159
        $region20: #{tpu_custom_call.1} parent=15 // pred_fallthru
          _
        // Predicated region
        $region21: #{tpu_custom_call.1} parent=15 // pred_check
          %p176 = pneg %p78
        $region22: #{tpu_custom_call.1} parent=15 // pred_check_branch
          %178 = sbr.rel (%p176) target = $region24
        $region23: #{tpu_custom_call.1} parent=15 // pred_region
          %s179 = sand.u32 %s68, 1
          %s180 = scalar_lea.sflag [#allocation7], %s179
          %s181 = sand.u32 %s68, 1
          %s182 = smul.addr %s181, 2
          %s183 = scalar_lea.vmem [#allocation6], %s182
          %s184 = smul.u32 2, %s24
          %s186 = ssub.s32 32, 32
          %187 = vsyncadd %s180, %s186
          %s188 = smul.addr %s23, 2
          %s189 = sadd.s32 %s184, %s188
          %s190 = smul.addr %s189, 16
          %s191 = scalar_lea.hbm %s1, %s190
          %s193 = sshll.u32 %s183, 4
          %s194 = int_to_ptr.vmem [resolvable:$true] %s193
          %196 = dma.hbm_to_vmem [thread:$0]  %s191, 32, %s194, %s180
        $region24: #{tpu_custom_call.1} parent=15 // pred_fallthru
          _
      $region16: #{tpu_custom_call.1} parent=5 // pred_fallthru
        _
      %p197 = scmp.le.s32.totalorder 1, %s16
      %p198 = scmp.lt.s32.totalorder %s16, 3
      %p199 = pnand %p197, %p198
      %p200 = pneg %p199
      // Predicated region
      $region25: #{tpu_custom_call.1} parent=5 // pred_check
        _
      $region26: #{tpu_custom_call.1} parent=5 // pred_check_branch
        %202 = sbr.rel (%p199) target = $region28
      $region27: #{tpu_custom_call.1} parent=5 // pred_region
        %s203 = ssub.s32 %s16, 1
        %s204 = sand.u32 %s43, 1
        %s205 = scalar_lea.sflag [#allocation5], %s204
        %s206 = sand.u32 %s43, 1
        %s207 = smul.addr %s206, 8
        %s208 = scalar_lea.vmem [#allocation4], %s207
        // Predicated region
        $region29: #{tpu_custom_call.1} parent=27 // pred_check
          %p209 = pneg %p56
        $region30: #{tpu_custom_call.1} parent=27 // pred_check_branch
          %211 = sbr.rel (%p209) target = $region32
        $region31: #{tpu_custom_call.1} parent=27 // pred_region
          %212 = dma.done %s205, 128
        $region32: #{tpu_custom_call.1} parent=27 // pred_fallthru
          _
        %s213 = sand.u32 %s71, 1
        %s214 = scalar_lea.sflag [#allocation7], %s213
        %s215 = sand.u32 %s71, 1
        %s216 = smul.addr %s215, 2
        %s217 = scalar_lea.vmem [#allocation6], %s216
        // Predicated region
        $region33: #{tpu_custom_call.1} parent=27 // pred_check
          %p218 = pneg %p84
        $region34: #{tpu_custom_call.1} parent=27 // pred_check_branch
          %220 = sbr.rel (%p218) target = $region36
        $region35: #{tpu_custom_call.1} parent=27 // pred_region
          %221 = dma.done %s214, 32
        $region36: #{tpu_custom_call.1} parent=27 // pred_fallthru
          _
        %s222 = sand.u32 %s43, 1
        %s223 = scalar_lea.sflag [#allocation5], %s222
        %s224 = sand.u32 %s43, 1
        %s225 = smul.addr %s224, 8
        %s226 = scalar_lea.vmem [#allocation4], %s225
        %p227 = pneg %p56
        %p228 = pneg %p53
        %s229 = sand.u32 %s71, 1
        %s230 = scalar_lea.sflag [#allocation7], %s229
        %s231 = sand.u32 %s71, 1
        %s232 = smul.addr %s231, 2
        %s233 = scalar_lea.vmem [#allocation6], %s232
        %p234 = pneg %p84
        %p235 = pneg %p81
        %p236 = pneg %p110
        %p237 = pneg %p107
        %p238 = scmp.lt.s32.totalorder %s25, 1
        %s239 = scalar_select %p238, %s25, 1
        %s240 = smul.addr %s239, 4
        %s241 = scalar_lea.vmem %s2, %s240
        %p242 = pneg %p136
        %p243 = pneg %p133
        %p244 = scmp.lt.s32.totalorder %s25, 1
        %s245 = scalar_select %p244, %s25, 1
        %s246 = smul.addr %s245, 4
        %s247 = scalar_lea.vmem %s3, %s246
        %s248 = smul.u32 2, %s26
        %s249 = smul.u32 2, %s26
        %p250 = scmp.lt.s32.totalorder %s25, 1
        %s251 = scalar_select %p250, %s25, 1
        %s252 = smul.addr %s251, 4
        %s253 = scalar_lea.vmem %s2, %s252
        %p254 = scmp.lt.s32.totalorder %s25, 1
        %s255 = scalar_select %p254, %s25, 1
        %s256 = smul.addr %s255, 4
        %s257 = scalar_lea.vmem %s3, %s256
        %p258 = scmp.eq.s32.totalorder %s26, 0
        // Predicated region
        $region37: #{tpu_custom_call.1} parent=27 // pred_check
          %p259 = pneg %p258
        $region38: #{tpu_custom_call.1} parent=27 // pred_check_branch
          %261 = sbr.rel (%p259) target = $region40
        $region39: #{tpu_custom_call.1} parent=27 // pred_region
          %262 = vst [vmem:[#allocation2] sm:$0xff] 0.0
          %263 = vst [vmem:[#allocation3] sm:$0xff] 0.0
        $region40: #{tpu_custom_call.1} parent=27 // pred_fallthru
          _
        %v264 = vld [vmem:[%s208] sm:$0xff]
        %v265 = vld [vmem:[%s217] sm:$0x3]
        %v267 = vcombine.high %v264, %v264
        %vm269 = vcmask 1043456
        %v270 = vsel %vm269, %v264, -inf
        %v271 = vrot.slane %v270, 4
        %v272 = vmax.f32 %v270, %v271
        %v273 = vrot.slane %v272, 2
        %v274 = vmax.f32 %v272, %v273
        %v275 = vrot.slane %v274, 1
        %v276 = vmax.f32 %v274, %v275
        %v277 = vsel %vm269, %v267, -inf
        %v278 = vrot.slane %v277, 4
        %v279 = vmax.f32 %v277, %v278
        %v280 = vrot.slane %v279, 2
        %v281 = vmax.f32 %v279, %v280
        %v282 = vrot.slane %v281, 1
        %v283 = vmax.f32 %v281, %v282
        %v286 = vcombine.low %v276, %v283
        %v288 = vsub.f32 %v264, %v286
        %v289 = vmul.f32 %v288, 1.442695
        %v290 = vpow.pop %v289
        %v292 = vcombine.high %v290, %v290
        %v294 = vsel %vm269, %v290, 0.0
        %v295 = vrot.slane %v294, 4
        %v296 = vadd.f32 %v294, %v295
        %v297 = vrot.slane %v296, 2
        %v298 = vadd.f32 %v296, %v297
        %v299 = vrot.slane %v298, 1
        %v300 = vadd.f32 %v298, %v299
        %v301 = vsel %vm269, %v292, 0.0
        %v302 = vrot.slane %v301, 4
        %v303 = vadd.f32 %v301, %v302
        %v304 = vrot.slane %v303, 2
        %v305 = vadd.f32 %v303, %v304
        %v306 = vrot.slane %v305, 1
        %v307 = vadd.f32 %v305, %v306
        %v308 = vrcp.pop %v300
        %v309 = vrcp.pop %v307
        %v312 = vcombine.low %v308, %v309
        %v314 = vmul.f32 %v290, %v312
        %v315 = vlaneseq
        %v316 = vshrl.u32 %v315, 7
        %v317 = vlaneseq
        %v318 = vshrl.u32 %v317, 7
        %v319 = vsub.s32 0, %v318
        %v320 = vrot.slane %v265, %v319
        %v321 = vlaneseq
        %v322 = vshrl.u32 %v321, 7
        %v323 = vsub.s32 1, %v322
        %v324 = vrot.slane %v265, %v323
        %vm325 = vcmp.eq.s32.totalorder %v316, %v320
        %vm326 = vcmp.eq.s32.totalorder %v316, %v324
        %v327 = vld [vmem:[#allocation2] sm:$0xff]
        %v329 = vcombine.high %v314, %v314
        %v331 = vsel %vm325, %v314, 0.0
        %v332 = vsel %vm326, %v329, 0.0
        %v335 = vcombine.low %v331, %v332
        %v337 = vadd.f32 %v327, %v335
        %338 = vst [vmem:[#allocation2] sm:$0xff] %v337
        %v339 = vld [vmem:[#allocation3] sm:$0xff]
        %v340 = vsel %vm325, 1.0, %v314
        %v341 = vsel %vm326, 1.0, %v329
        %v344 = vcombine.low %v340, %v341
        %v346 = vadd.f32 %v339, %v344
        %347 = vst [vmem:[#allocation3] sm:$0xff] %v346
        // Predicated region
        $region41: #{tpu_custom_call.1} parent=27 // pred_check
          %p348 = pneg %p258
        $region42: #{tpu_custom_call.1} parent=27 // pred_check_branch
          %350 = sbr.rel (%p348) target = $region44
        $region43: #{tpu_custom_call.1} parent=27 // pred_region
          %v351 = vld [vmem:[#allocation2] sm:$0xff]
          %v353 = vcombine.high %v351, %v351
          %v355 = vsel %vm269, %v351, 0.0
          %v356 = vsel %vm269, %v353, 0.0
          %v357 = vadd.f32 %v355, %v356
          %358 = vadd.xlane.f32.xlu0 %v357
          %v359 = vpop.xlane.xlu0 %358
          %vm360 = vcmask 3072
          %361 = vst.msk [vmem:[%s253] sm:$0xf] %vm360, %v359
          %v362 = vld [vmem:[#allocation3] sm:$0xff]
          %v364 = vcombine.high %v362, %v362
          %v366 = vsel %vm269, %v362, 0.0
          %v367 = vsel %vm269, %v364, 0.0
          %v368 = vadd.f32 %v366, %v367
          %369 = vadd.xlane.f32.xlu0 %v368
          %v370 = vpop.xlane.xlu0 %369
          %371 = vst.msk [vmem:[%s257] sm:$0xf] %vm360, %v370
        $region44: #{tpu_custom_call.1} parent=27 // pred_fallthru
          _
        %p372 = scmp.lt.s32.totalorder %s25, 1
        %s373 = scalar_select %p372, %s25, 1
        %s374 = smul.addr %s373, 4
        %s375 = scalar_lea.vmem %s2, %s374
        %p376 = scmp.lt.s32.totalorder %s25, 1
        %s377 = scalar_select %p376, %s25, 1
        %s378 = smul.addr %s377, 4
        %s379 = scalar_lea.vmem %s3, %s378
        // Predicated region
        $region45: #{tpu_custom_call.1} parent=27 // pred_check
          %p380 = pneg %p107
        $region46: #{tpu_custom_call.1} parent=27 // pred_check_branch
          %382 = sbr.rel (%p380) target = $region48
        $region47: #{tpu_custom_call.1} parent=27 // pred_region
          _
        $region48: #{tpu_custom_call.1} parent=27 // pred_fallthru
          _
        // Predicated region
        $region49: #{tpu_custom_call.1} parent=27 // pred_check
          %p383 = pneg %p133
        $region50: #{tpu_custom_call.1} parent=27 // pred_check_branch
          %385 = sbr.rel (%p383) target = $region52
        $region51: #{tpu_custom_call.1} parent=27 // pred_region
          _
        $region52: #{tpu_custom_call.1} parent=27 // pred_fallthru
          _
      $region28: #{tpu_custom_call.1} parent=5 // pred_fallthru
        _
      %p386 = scmp.le.s32.totalorder 2, %s16
      // Predicated region
      $region53: #{tpu_custom_call.1} parent=5 // pred_check
        %p387 = pneg %p386
      $region54: #{tpu_custom_call.1} parent=5 // pred_check_branch
        %389 = sbr.rel (%p387) target = $region56
      $region55: #{tpu_custom_call.1} parent=5 // pred_region
        %s390 = ssub.s32 %s16, 2
        // Predicated region
        $region57: #{tpu_custom_call.1} parent=55 // pred_check
          %p391 = pneg %p113
        $region58: #{tpu_custom_call.1} parent=55 // pred_check_branch
          %393 = sbr.rel (%p391) target = $region60
        $region59: #{tpu_custom_call.1} parent=55 // pred_region
          %p394 = scmp.lt.s32.totalorder %s27, 1
          %s395 = scalar_select %p394, %s27, 1
          %s396 = smul.addr %s395, 4
          %s397 = scalar_lea.vmem %s2, %s396
        $region60: #{tpu_custom_call.1} parent=55 // pred_fallthru
          _
        // Predicated region
        $region61: #{tpu_custom_call.1} parent=55 // pred_check
          %p398 = pneg %p139
        $region62: #{tpu_custom_call.1} parent=55 // pred_check_branch
          %400 = sbr.rel (%p398) target = $region64
        $region63: #{tpu_custom_call.1} parent=55 // pred_region
          %p401 = scmp.lt.s32.totalorder %s27, 1
          %s402 = scalar_select %p401, %s27, 1
          %s403 = smul.addr %s402, 4
          %s404 = scalar_lea.vmem %s3, %s403
        $region64: #{tpu_custom_call.1} parent=55 // pred_fallthru
          _
      $region56: #{tpu_custom_call.1} parent=5 // pred_fallthru
        _
    $region6: #{tpu_custom_call.1} parent=1 // loop_footer
      %s20 = sadd.s32 1, %s16
    $region7: #{tpu_custom_call.1} parent=1 // loop_footer_branch
      %15 = sbr.rel target = $region3
    $region8: #{tpu_custom_call.1} parent=1 // loop_exit
      _
    %405 = vsyncpa [#allocation5], 1
    %s406 = scalar_lea.sflag [#allocation5], 1
    %407 = vsyncpa %s406, 1
    %408 = vsyncpa [#allocation7], 1
    %s409 = scalar_lea.sflag [#allocation7], 1
    %410 = vsyncpa %s409, 1

</llo_original>
